<compile_context>
chip_gen: v5e
topology: v5e:2x2
jax: 0.10.0
libtpu: 0.0.40
codegen_flags: <defaults>
</compile_context>

<pallas_src>
import functools

import jax
import jax.numpy as jnp
from jax import lax
from jax.experimental import pallas as pl
from jax.experimental.pallas import tpu as pltpu


_LANE_BYTES_CAP = 128 * 1024        # max bytes per block row (lane extent)
_BLOCK_BYTES_CAP = 4 * 1024 * 1024  # target bytes per output block
_VMEM_LIMIT = 48 * 1024 * 1024      # safe on v5e/v6e (128 MiB) and v7x (64 MiB)


# --------------------------------------------------------------------------
# tiling helpers (static Python on shapes)
# --------------------------------------------------------------------------
def _divisors(n):
    out = set()
    i = 1
    while i * i <= n:
        if n % i == 0:
            out.add(i)
            out.add(n // i)
        i += 1
    return out


def _pick_block(n, align, cap):
    """Block size for an axis of length n: a divisor of n that is a multiple
    of `align` (or the full axis), as large as possible while <= cap,
    otherwise as small as possible.  Keeps every BlockSpec dim either
    (8,128)-aligned or equal to the full array dim."""
    legal = {t for t in _divisors(n) if t % align == 0}
    legal.add(n)
    fitting = [t for t in legal if t <= cap]
    return max(fitting) if fitting else min(legal)


def _choose_tiles(n_cell, n_gene, d_lanes, itemsize):
    # gene tile: minor dim of the x block -> multiple of 128 or full axis
    gt = _pick_block(n_gene, 128, max(1, _LANE_BYTES_CAP // (d_lanes * itemsize)))
    # cell tile: sublane dim -> multiple of 8 or full axis, block of a few MiB
    ct = _pick_block(n_cell, 8, max(1, _BLOCK_BYTES_CAP // (gt * d_lanes * itemsize)))
    # give v7x's second TensorCore work if the (parallel) cell grid would be 1
    if n_cell // ct == 1 and ct % 16 == 0:
        ct //= 2
    return ct, gt


# --------------------------------------------------------------------------
# kernels
# --------------------------------------------------------------------------
def _flat_kernel(x_ref, emb_ref, out_ref):
    # x_ref:   (CT, GT)      expression values for this (cell, gene) tile
    # emb_ref: (1, GT*D)     zero-padded, flattened gene embeddings
    # out_ref: (CT, GT*D)    lane-dense flat view of the output tile
    ct, gt = x_ref.shape
    gtd = out_ref.shape[1]
    d = gtd // gt
    # x[c, l // d] at every lane l; only lanes with l % d == 0 are selected.
    x_rep = jnp.broadcast_to(x_ref[...][:, :, None], (ct, gt, d)).reshape(ct, gtd)
    emb_b = jnp.broadcast_to(emb_ref[...], (ct, gtd))
    lane = lax.broadcasted_iota(jnp.int32, (ct, gtd), 1)
    out_ref[...] = jnp.where(lane % d == 0, x_rep, emb_b)


def _blocked_kernel(x_ref, emb_ref, out_ref):
    # Fallback: 3-D blocks with gene_dim on lanes (masked stores if gene_dim<128).
    # x_ref:   (CT, GT)
    # emb_ref: (GT, D)   zero-padded gene embeddings
    # out_ref: (CT, GT, D)
    ct, gt = x_ref.shape
    d = out_ref.shape[-1]
    first = lax.broadcasted_iota(jnp.int32, (gt, d), 1) == 0
    x_b = jnp.broadcast_to(x_ref[...][:, :, None], (ct, gt, d))
    e_b = jnp.broadcast_to(emb_ref[...], (ct, gt, d))
    out_ref[...] = jnp.where(first, x_b, e_b)


# --------------------------------------------------------------------------
# wrappers
# --------------------------------------------------------------------------
def _padded_emb(gene_emb, n_gene, out_dtype):
    # column 0 is a placeholder; it is always overwritten/never selected.
    return jnp.concatenate(
        [jnp.zeros((n_gene, 1), out_dtype), gene_emb.astype(out_dtype)], axis=1
    )


@jax.jit
def _gene_embeddings_flat(x, gene_emb):
    n_cell, n_gene = x.shape
    d = gene_emb.shape[1] + 1
    w = n_gene * d
    out_dtype = jnp.result_type(x.dtype, gene_emb.dtype)
    itemsize = jnp.dtype(out_dtype).itemsize

    emb_flat = _padded_emb(gene_emb, n_gene, out_dtype).reshape(1, w)
    x = x.astype(out_dtype)

    ct, gt = _choose_tiles(n_cell, n_gene, d, itemsize)
    grid = (n_cell // ct, n_gene // gt)

    out_flat = pl.pallas_call(
        _flat_kernel,
        out_shape=jax.ShapeDtypeStruct((n_cell, w), out_dtype),
        grid_spec=pltpu.PrefetchScalarGridSpec(
            num_scalar_prefetch=0,
            grid=grid,
            in_specs=[
                pl.BlockSpec((ct, gt), lambda i, j: (i, j)),
                pl.BlockSpec((1, gt * d), lambda i, j: (0, j)),
            ],
            out_specs=pl.BlockSpec((ct, gt * d), lambda i, j: (i, j)),
        ),
        compiler_params=pltpu.CompilerParams(
            dimension_semantics=("parallel", "arbitrary"),
            vmem_limit_bytes=_VMEM_LIMIT,
        ),
    )(x, emb_flat)
    # Same row-major bytes; a free (layout-preserving) reshape under jit.
    return out_flat.reshape(n_cell, n_gene, d)


@jax.jit
def _gene_embeddings_blocked(x, gene_emb):
    n_cell, n_gene = x.shape
    d = gene_emb.shape[1] + 1
    out_dtype = jnp.result_type(x.dtype, gene_emb.dtype)
    itemsize = jnp.dtype(out_dtype).itemsize

    emb_pad = _padded_emb(gene_emb, n_gene, out_dtype)
    x = x.astype(out_dtype)

    d_pad = ((d + 127) // 128) * 128  # lane padding of the block in VMEM
    ct, gt = _choose_tiles(n_cell, n_gene, d_pad, itemsize)
    grid = (n_cell // ct, n_gene // gt)

    return pl.pallas_call(
        _blocked_kernel,
        out_shape=jax.ShapeDtypeStruct((n_cell, n_gene, d), out_dtype),
        grid_spec=pltpu.PrefetchScalarGridSpec(
            num_scalar_prefetch=0,
            grid=grid,
            in_specs=[
                pl.BlockSpec((ct, gt), lambda i, j: (i, j)),
                pl.BlockSpec((gt, d), lambda i, j: (j, 0)),
            ],
            out_specs=pl.BlockSpec((ct, gt, d), lambda i, j: (i, j, 0)),
        ),
        compiler_params=pltpu.CompilerParams(
            dimension_semantics=("parallel", "arbitrary"),
            vmem_limit_bytes=_VMEM_LIMIT,
        ),
    )(x, emb_pad)


_IMPL_CACHE = {}


def gene_embeddings(x, gene_emb):
    """out[c, g, 0] = x[c, g]; out[c, g, 1:] = gene_emb[g, :]."""
    key = (x.shape, gene_emb.shape, str(x.dtype), str(gene_emb.dtype))
    impl = _IMPL_CACHE.get(key)
    if impl is not None:
        return impl(x, gene_emb)
    try:
        out = _gene_embeddings_flat(x, gene_emb)
        jax.block_until_ready(out)
        _IMPL_CACHE[key] = _gene_embeddings_flat
        return out
    except Exception:
        # Mosaic build without the lane-interleave relayout: use the 3-D
        # blocked kernel (still big tiles / padded-emb select, masked stores).
        _IMPL_CACHE[key] = _gene_embeddings_blocked
        return _gene_embeddings_blocked(x, gene_emb)


if __name__ == "__main__":
    # Small shapes consistent with the module: n_cell=8, n_gene=16, gene_dim=32
    n_cell, n_gene, gene_dim = 8, 16, 32

    key = jax.random.PRNGKey(0)
    kx, ke = jax.random.split(key)
    x = jax.random.normal(kx, (n_cell, n_gene), dtype=jnp.float32)
    gene_emb = jax.random.normal(ke, (n_gene, gene_dim - 1), dtype=jnp.float32)

    out = gene_embeddings(x, gene_emb)
    out = jax.block_until_ready(out)

    # Reference (same semantics as the PyTorch forward).
    ref = jnp.concatenate(
        [x[:, :, None],
         jnp.broadcast_to(gene_emb[None], (n_cell,) + gene_emb.shape)],
        axis=-1,
    )
    assert out.shape == (n_cell, n_gene, gene_dim), out.shape
    assert jnp.allclose(out, ref), "mismatch vs reference"

    print("KERNEL_OK")
</pallas_src>

<mosaic_0001>
module attributes {stable_mosaic.version = 11 : i64} {
  func.func @_flat_kernel(%arg0: i32, %arg1: i32, %arg2: memref<8x16xf32, #tpu.memory_space<vmem>>, %arg3: memref<1x512xf32, #tpu.memory_space<vmem>>, %arg4: memref<8x512xf32, #tpu.memory_space<vmem>>) attributes {dimension_semantics = [#tpu.dimension_semantics<parallel>, #tpu.dimension_semantics<arbitrary>], iteration_bounds = array<i64: 1, 1>, scalar_prefetch = 0 : i64, scratch_operands = 0 : i64, tpu.core_type = #tpu.core_type<tc>, window_params = [{transform_indices = @transform_0, window_bounds = array<i64: 8, 16>}, {transform_indices = @transform_1, window_bounds = array<i64: 1, 512>}, {transform_indices = @transform_2, window_bounds = array<i64: 8, 512>}]} {
    %c0 = arith.constant 0 : index
    %c0_0 = arith.constant 0 : index
    %0 = vector.load %arg2[%c0, %c0_0] : memref<8x16xf32, #tpu.memory_space<vmem>>, vector<8x16xf32>
    %1 = vector.shape_cast %0 : vector<8x16xf32> to vector<8x16x1xf32>
    %2 = vector.shape_cast %1 : vector<8x16x1xf32> to vector<8x16x1xf32>
    %3 = vector.broadcast %2 : vector<8x16x1xf32> to vector<8x16x32xf32>
    %4 = vector.shape_cast %3 : vector<8x16x32xf32> to vector<8x512xf32>
    %c0_1 = arith.constant 0 : index
    %c0_2 = arith.constant 0 : index
    %5 = vector.load %arg3[%c0_1, %c0_2] : memref<1x512xf32, #tpu.memory_space<vmem>>, vector<1x512xf32>
    %6 = vector.shape_cast %5 : vector<1x512xf32> to vector<1x512xf32>
    %7 = vector.broadcast %6 : vector<1x512xf32> to vector<8x512xf32>
    %8 = tpu.iota {dimensions = array<i32: 1>} : vector<8x512xi32>
    %c32_i32 = arith.constant 32 : i32
    %c0_i32 = arith.constant 0 : i32
    %9 = arith.cmpi eq, %c32_i32, %c0_i32 : i32
    %c1_i32 = arith.constant 1 : i32
    %10 = arith.select %9, %c1_i32, %c32_i32 : i32
    %11 = vector.broadcast %10 : i32 to vector<8x512xi32>
    %12 = arith.remsi %8, %11 : vector<8x512xi32>
    %c0_i32_3 = arith.constant 0 : i32
    %13 = vector.broadcast %c0_i32_3 : i32 to vector<8x512xi32>
    %14 = arith.cmpi ne, %12, %13 : vector<8x512xi32>
    %c0_i32_4 = arith.constant 0 : i32
    %15 = vector.broadcast %c0_i32_4 : i32 to vector<8x512xi32>
    %16 = arith.cmpi slt, %12, %15 : vector<8x512xi32>
    %c0_i32_5 = arith.constant 0 : i32
    %17 = arith.cmpi slt, %10, %c0_i32_5 : i32
    %18 = vector.broadcast %17 : i1 to vector<8x512xi1>
    %19 = vector.broadcast %18 : vector<8x512xi1> to vector<8x512xi1>
    %20 = arith.xori %16, %19 : vector<8x512xi1>
    %21 = arith.andi %20, %14 : vector<8x512xi1>
    %22 = vector.broadcast %10 : i32 to vector<8x512xi32>
    %23 = arith.addi %12, %22 : vector<8x512xi32>
    %24 = arith.select %21, %23, %12 : vector<8x512xi1>, vector<8x512xi32>
    %c0_i32_6 = arith.constant 0 : i32
    %25 = vector.broadcast %c0_i32_6 : i32 to vector<8x512xi32>
    %26 = arith.cmpi eq, %24, %25 : vector<8x512xi32>
    %27 = arith.select %26, %4, %7 : vector<8x512xi1>, vector<8x512xf32>
    %c0_7 = arith.constant 0 : index
    %c0_8 = arith.constant 0 : index
    %28 = vector.load %arg4[%c0_7, %c0_8] : memref<8x512xf32, #tpu.memory_space<vmem>>, vector<8x512xf32>
    tpu.vector_store %arg4[%c0_7, %c0_8], %27 {strides = array<i32>} : memref<8x512xf32, #tpu.memory_space<vmem>>, vector<8x512xf32>,
    return
  }
  func.func @transform_0(%arg0: i32, %arg1: i32) -> (i32, i32) {
    %c0_i32 = arith.constant 0 : i32
    return %arg0, %arg1 : i32, i32
  }
  func.func @transform_1(%arg0: i32, %arg1: i32) -> (i32, i32) {
    %c0_i32 = arith.constant 0 : i32
    %c0_i32_0 = arith.constant 0 : i32
    return %c0_i32, %arg1 : i32, i32
  }
  func.func @transform_2(%arg0: i32, %arg1: i32) -> (i32, i32) {
    %c0_i32 = arith.constant 0 : i32
    return %arg0, %arg1 : i32, i32
  }
}

module attributes {stable_mosaic.version = 11 : i64} {
  func.func @_blocked_kernel(%arg0: i32, %arg1: i32, %arg2: memref<8x16xf32, #tpu.memory_space<vmem>>, %arg3: memref<16x32xf32, #tpu.memory_space<vmem>>, %arg4: memref<8x16x32xf32, #tpu.memory_space<vmem>>) attributes {dimension_semantics = [#tpu.dimension_semantics<parallel>, #tpu.dimension_semantics<arbitrary>], iteration_bounds = array<i64: 1, 1>, scalar_prefetch = 0 : i64, scratch_operands = 0 : i64, tpu.core_type = #tpu.core_type<tc>, window_params = [{transform_indices = @transform_0, window_bounds = array<i64: 8, 16>}, {transform_indices = @transform_1, window_bounds = array<i64: 16, 32>}, {transform_indices = @transform_2, window_bounds = array<i64: 8, 16, 32>}]} {
    %0 = tpu.iota {dimensions = array<i32: 1>} : vector<16x32xi32>
    %c0_i32 = arith.constant 0 : i32
    %1 = vector.broadcast %c0_i32 : i32 to vector<16x32xi32>
    %2 = arith.cmpi eq, %0, %1 : vector<16x32xi32>
    %c0 = arith.constant 0 : index
    %c0_0 = arith.constant 0 : index
    %3 = vector.load %arg2[%c0, %c0_0] : memref<8x16xf32, #tpu.memory_space<vmem>>, vector<8x16xf32>
    %4 = vector.shape_cast %3 : vector<8x16xf32> to vector<8x16x1xf32>
    %5 = vector.shape_cast %4 : vector<8x16x1xf32> to vector<8x16x1xf32>
    %6 = vector.broadcast %5 : vector<8x16x1xf32> to vector<8x16x32xf32>
    %c0_1 = arith.constant 0 : index
    %c0_2 = arith.constant 0 : index
    %7 = vector.load %arg3[%c0_1, %c0_2] : memref<16x32xf32, #tpu.memory_space<vmem>>, vector<16x32xf32>
    %8 = vector.shape_cast %7 : vector<16x32xf32> to vector<1x16x32xf32>
    %9 = vector.broadcast %8 : vector<1x16x32xf32> to vector<8x16x32xf32>
    %10 = vector.shape_cast %2 : vector<16x32xi1> to vector<1x16x32xi1>
    %11 = vector.broadcast %10 : vector<1x16x32xi1> to vector<8x16x32xi1>
    %12 = arith.select %11, %6, %9 : vector<8x16x32xi1>, vector<8x16x32xf32>
    %c0_3 = arith.constant 0 : index
    %c0_4 = arith.constant 0 : index
    %c0_5 = arith.constant 0 : index
    %13 = vector.load %arg4[%c0_3, %c0_4, %c0_5] : memref<8x16x32xf32, #tpu.memory_space<vmem>>, vector<8x16x32xf32>
    tpu.vector_store %arg4[%c0_3, %c0_4, %c0_5], %12 {strides = array<i32>} : memref<8x16x32xf32, #tpu.memory_space<vmem>>, vector<8x16x32xf32>,
    return
  }
  func.func @transform_0(%arg0: i32, %arg1: i32) -> (i32, i32) {
    %c0_i32 = arith.constant 0 : i32
    return %arg0, %arg1 : i32, i32
  }
  func.func @transform_1(%arg0: i32, %arg1: i32) -> (i32, i32) {
    %c0_i32 = arith.constant 0 : i32
    %c0_i32_0 = arith.constant 0 : i32
    return %arg1, %c0_i32 : i32, i32
  }
  func.func @transform_2(%arg0: i32, %arg1: i32) -> (i32, i32, i32) {
    %c0_i32 = arith.constant 0 : i32
    %c0_i32_0 = arith.constant 0 : i32
    return %arg0, %arg1, %c0_i32 : i32, i32, i32
  }
}

</mosaic_0001>

<llo_original>
// kernel: _gene_embeddings_flat.1
$region0: #{_gene_embeddings_flat.1}
  #allocation0 [shape = 'u32[]', space=smem, size = 0x4, offset = 0x4, fixed_abs, tag = 'smem constant byte address 0x4 - core index']
  #allocation1 [shape = 'u32[72,128]{1,0:T(1,128)}', space=vmem, size = 0x9000, scoped, tag = 'internal scratch']
  %s0 = inlined_call_operand.vmem [shape: f32[8,16], index: 0, kind: input, shape index: {}]
  %s1 = inlined_call_operand.vmem [shape: f32[1,512], index: 1, kind: input, shape index: {}]
  %s2 = inlined_call_operand.vmem [shape: f32[8,512], index: 2, kind: output, shape index: {}]
  %s3 = sld [smem:[#allocation0]]
  $region18: #{_gene_embeddings_flat.1} parent=0
    _
  %s5 = ssub.s32 1, %s3
  %s6 = scalar_select 0, %s5, %s3
  // Predicated region
  $region2: #{_gene_embeddings_flat.1} parent=0 // pred_check
    _
  $region3: #{_gene_embeddings_flat.1} parent=0 // pred_check_branch
    %8 = sbr.rel (0) target = $region5
  $region4: #{_gene_embeddings_flat.1} parent=0 // pred_region
    _
  $region5: #{_gene_embeddings_flat.1} parent=0 // pred_fallthru
    _
  // Predicated region
  $region6: #{_gene_embeddings_flat.1} parent=0 // pred_check
    _
  $region7: #{_gene_embeddings_flat.1} parent=0 // pred_check_branch
    %10 = sbr.rel (0) target = $region9
  $region8: #{_gene_embeddings_flat.1} parent=0 // pred_region
    _
  $region9: #{_gene_embeddings_flat.1} parent=0 // pred_fallthru
    _
  %v11 = vld [vmem:[%s0] sm:$0xff]
  %v12 = vperm.slane %v11, 0
  %v13 = vlaneseq
  %v14 = vshrl.u32 %v13, 7
  %16 = vset.pattern.permute.xlu0 %v14
  %17 = vperm.xlu0 %16, %v12
  %v18 = vpop.permute.xlu0 %17
  %v19 = vlaneseq
  %v20 = vshrl.u32 %v19, 7
  %v21 = vadd.s32 %v20, 8
  %22 = vset.pattern.permute.xlu0 %v21
  %23 = vperm.xlu0 %22, %v12
  %v24 = vpop.permute.xlu0 %23
  %v25 = vperm.slane %v11, 1
  %v26 = vlaneseq
  %v27 = vshrl.u32 %v26, 7
  %29 = vset.pattern.permute.xlu0 %v27
  %30 = vperm.xlu0 %29, %v25
  %v31 = vpop.permute.xlu0 %30
  %v32 = vlaneseq
  %v33 = vshrl.u32 %v32, 7
  %v34 = vadd.s32 %v33, 8
  %35 = vset.pattern.permute.xlu0 %v34
  %36 = vperm.xlu0 %35, %v25
  %v37 = vpop.permute.xlu0 %36
  %v38 = vperm.slane %v11, 2
  %v39 = vlaneseq
  %v40 = vshrl.u32 %v39, 7
  %42 = vset.pattern.permute.xlu0 %v40
  %43 = vperm.xlu0 %42, %v38
  %v44 = vpop.permute.xlu0 %43
  %v45 = vlaneseq
  %v46 = vshrl.u32 %v45, 7
  %v47 = vadd.s32 %v46, 8
  %48 = vset.pattern.permute.xlu0 %v47
  %49 = vperm.xlu0 %48, %v38
  %v50 = vpop.permute.xlu0 %49
  %v51 = vperm.slane %v11, 3
  %v52 = vlaneseq
  %v53 = vshrl.u32 %v52, 7
  %55 = vset.pattern.permute.xlu0 %v53
  %56 = vperm.xlu0 %55, %v51
  %v57 = vpop.permute.xlu0 %56
  %v58 = vlaneseq
  %v59 = vshrl.u32 %v58, 7
  %v60 = vadd.s32 %v59, 8
  %61 = vset.pattern.permute.xlu0 %v60
  %62 = vperm.xlu0 %61, %v51
  %v63 = vpop.permute.xlu0 %62
  %v64 = vperm.slane %v11, 4
  %v65 = vlaneseq
  %v66 = vshrl.u32 %v65, 7
  %68 = vset.pattern.permute.xlu0 %v66
  %69 = vperm.xlu0 %68, %v64
  %v70 = vpop.permute.xlu0 %69
  %v71 = vlaneseq
  %v72 = vshrl.u32 %v71, 7
  %v73 = vadd.s32 %v72, 8
  %74 = vset.pattern.permute.xlu0 %v73
  %75 = vperm.xlu0 %74, %v64
  %v76 = vpop.permute.xlu0 %75
  %v77 = vperm.slane %v11, 5
  %v78 = vlaneseq
  %v79 = vshrl.u32 %v78, 7
  %81 = vset.pattern.permute.xlu0 %v79
  %82 = vperm.xlu0 %81, %v77
  %v83 = vpop.permute.xlu0 %82
  %v84 = vlaneseq
  %v85 = vshrl.u32 %v84, 7
  %v86 = vadd.s32 %v85, 8
  %87 = vset.pattern.permute.xlu0 %v86
  %88 = vperm.xlu0 %87, %v77
  %v89 = vpop.permute.xlu0 %88
  %v90 = vperm.slane %v11, 6
  %v91 = vlaneseq
  %v92 = vshrl.u32 %v91, 7
  %94 = vset.pattern.permute.xlu0 %v92
  %95 = vperm.xlu0 %94, %v90
  %v96 = vpop.permute.xlu0 %95
  %v97 = vlaneseq
  %v98 = vshrl.u32 %v97, 7
  %v99 = vadd.s32 %v98, 8
  %100 = vset.pattern.permute.xlu0 %v99
  %101 = vperm.xlu0 %100, %v90
  %v102 = vpop.permute.xlu0 %101
  %v103 = vperm.slane %v11, 7
  %v104 = vlaneseq
  %v105 = vshrl.u32 %v104, 7
  %107 = vset.pattern.permute.xlu0 %v105
  %108 = vperm.xlu0 %107, %v103
  %v109 = vpop.permute.xlu0 %108
  %v110 = vlaneseq
  %v111 = vshrl.u32 %v110, 7
  %v112 = vadd.s32 %v111, 8
  %113 = vset.pattern.permute.xlu0 %v112
  %114 = vperm.xlu0 %113, %v103
  %v115 = vpop.permute.xlu0 %114
  %v116 = vrot.slane %v44, 4
  %vm117 = vcmask 1047556
  %v118 = vsel %vm117, %v116, %v18
  %v119 = vrot.slane %v18, 4
  %v120 = vsel %vm117, %v44, %v119
  %v122 = vunpack.c.l.s4 1983009808
  %v123 = vunpack.c.0.s8 %v122
  %v124 = vperm.slane %v118, %v123
  %v126 = vunpack.c.l.s4 1983009808
  %v127 = vunpack.c.0.s8 %v126
  %v128 = vperm.slane %v120, %v127
  %v129 = vrot.slane %v57, 4
  %v130 = vsel %vm117, %v129, %v31
  %v131 = vrot.slane %v31, 4
  %v132 = vsel %vm117, %v57, %v131
  %v134 = vunpack.c.l.s4 1983009808
  %v135 = vunpack.c.0.s8 %v134
  %v136 = vperm.slane %v130, %v135
  %v138 = vunpack.c.l.s4 1983009808
  %v139 = vunpack.c.0.s8 %v138
  %v140 = vperm.slane %v132, %v139
  %v141 = vrot.slane %v96, 4
  %v142 = vsel %vm117, %v141, %v70
  %v143 = vrot.slane %v70, 4
  %v144 = vsel %vm117, %v96, %v143
  %v146 = vunpack.c.l.s4 1983009808
  %v147 = vunpack.c.0.s8 %v146
  %v148 = vperm.slane %v142, %v147
  %v150 = vunpack.c.l.s4 1983009808
  %v151 = vunpack.c.0.s8 %v150
  %v152 = vperm.slane %v144, %v151
  %v153 = vrot.slane %v109, 4
  %v154 = vsel %vm117, %v153, %v83
  %v155 = vrot.slane %v83, 4
  %v156 = vsel %vm117, %v109, %v155
  %v158 = vunpack.c.l.s4 1983009808
  %v159 = vunpack.c.0.s8 %v158
  %v160 = vperm.slane %v154, %v159
  %v162 = vunpack.c.l.s4 1983009808
  %v163 = vunpack.c.0.s8 %v162
  %v164 = vperm.slane %v156, %v163
  %v165 = vrot.slane %v136, 4
  %v166 = vsel %vm117, %v165, %v124
  %v167 = vrot.slane %v124, 4
  %v168 = vsel %vm117, %v136, %v167
  %v170 = vunpack.c.l.s4 1934713408
  %v171 = vunpack.c.0.s8 %v170
  %v172 = vperm.slane %v166, %v171
  %v174 = vunpack.c.l.s4 1934713408
  %v175 = vunpack.c.0.s8 %v174
  %v176 = vperm.slane %v168, %v175
  %v177 = vrot.slane %v140, 4
  %v178 = vsel %vm117, %v177, %v128
  %v179 = vrot.slane %v128, 4
  %v180 = vsel %vm117, %v140, %v179
  %v182 = vunpack.c.l.s4 1934713408
  %v183 = vunpack.c.0.s8 %v182
  %v184 = vperm.slane %v178, %v183
  %v186 = vunpack.c.l.s4 1934713408
  %v187 = vunpack.c.0.s8 %v186
  %v188 = vperm.slane %v180, %v187
  %v189 = vrot.slane %v160, 4
  %v190 = vsel %vm117, %v189, %v148
  %v191 = vrot.slane %v148, 4
  %v192 = vsel %vm117, %v160, %v191
  %v194 = vunpack.c.l.s4 1934713408
  %v195 = vunpack.c.0.s8 %v194
  %v196 = vperm.slane %v190, %v195
  %v198 = vunpack.c.l.s4 1934713408
  %v199 = vunpack.c.0.s8 %v198
  %v200 = vperm.slane %v192, %v199
  %v201 = vrot.slane %v164, 4
  %v202 = vsel %vm117, %v201, %v152
  %v203 = vrot.slane %v152, 4
  %v204 = vsel %vm117, %v164, %v203
  %v206 = vunpack.c.l.s4 1934713408
  %v207 = vunpack.c.0.s8 %v206
  %v208 = vperm.slane %v202, %v207
  %v210 = vunpack.c.l.s4 1934713408
  %v211 = vunpack.c.0.s8 %v210
  %v212 = vperm.slane %v204, %v211
  %v213 = vrot.slane %v196, 4
  %v214 = vsel %vm117, %v213, %v172
  %v215 = vrot.slane %v172, 4
  %v216 = vsel %vm117, %v196, %v215
  %v217 = vrot.slane %v200, 4
  %v218 = vsel %vm117, %v217, %v176
  %v219 = vrot.slane %v176, 4
  %v220 = vsel %vm117, %v200, %v219
  %v221 = vrot.slane %v208, 4
  %v222 = vsel %vm117, %v221, %v184
  %v223 = vrot.slane %v184, 4
  %v224 = vsel %vm117, %v208, %v223
  %v225 = vrot.slane %v212, 4
  %v226 = vsel %vm117, %v225, %v188
  %v227 = vrot.slane %v188, 4
  %v228 = vsel %vm117, %v212, %v227
  %v229 = vrot.slane %v50, 4
  %v230 = vsel %vm117, %v229, %v24
  %v231 = vrot.slane %v24, 4
  %v232 = vsel %vm117, %v50, %v231
  %v234 = vunpack.c.l.s4 1983009808
  %v235 = vunpack.c.0.s8 %v234
  %v236 = vperm.slane %v230, %v235
  %v238 = vunpack.c.l.s4 1983009808
  %v239 = vunpack.c.0.s8 %v238
  %v240 = vperm.slane %v232, %v239
  %v241 = vrot.slane %v63, 4
  %v242 = vsel %vm117, %v241, %v37
  %v243 = vrot.slane %v37, 4
  %v244 = vsel %vm117, %v63, %v243
  %v246 = vunpack.c.l.s4 1983009808
  %v247 = vunpack.c.0.s8 %v246
  %v248 = vperm.slane %v242, %v247
  %v250 = vunpack.c.l.s4 1983009808
  %v251 = vunpack.c.0.s8 %v250
  %v252 = vperm.slane %v244, %v251
  %v253 = vrot.slane %v102, 4
  %v254 = vsel %vm117, %v253, %v76
  %v255 = vrot.slane %v76, 4
  %v256 = vsel %vm117, %v102, %v255
  %v258 = vunpack.c.l.s4 1983009808
  %v259 = vunpack.c.0.s8 %v258
  %v260 = vperm.slane %v254, %v259
  %v262 = vunpack.c.l.s4 1983009808
  %v263 = vunpack.c.0.s8 %v262
  %v264 = vperm.slane %v256, %v263
  %v265 = vrot.slane %v115, 4
  %v266 = vsel %vm117, %v265, %v89
  %v267 = vrot.slane %v89, 4
  %v268 = vsel %vm117, %v115, %v267
  %v270 = vunpack.c.l.s4 1983009808
  %v271 = vunpack.c.0.s8 %v270
  %v272 = vperm.slane %v266, %v271
  %v274 = vunpack.c.l.s4 1983009808
  %v275 = vunpack.c.0.s8 %v274
  %v276 = vperm.slane %v268, %v275
  %v277 = vrot.slane %v248, 4
  %v278 = vsel %vm117, %v277, %v236
  %v279 = vrot.slane %v236, 4
  %v280 = vsel %vm117, %v248, %v279
  %v282 = vunpack.c.l.s4 1934713408
  %v283 = vunpack.c.0.s8 %v282
  %v284 = vperm.slane %v278, %v283
  %v286 = vunpack.c.l.s4 1934713408
  %v287 = vunpack.c.0.s8 %v286
  %v288 = vperm.slane %v280, %v287
  %v289 = vrot.slane %v252, 4
  %v290 = vsel %vm117, %v289, %v240
  %v291 = vrot.slane %v240, 4
  %v292 = vsel %vm117, %v252, %v291
  %v294 = vunpack.c.l.s4 1934713408
  %v295 = vunpack.c.0.s8 %v294
  %v296 = vperm.slane %v290, %v295
  %v298 = vunpack.c.l.s4 1934713408
  %v299 = vunpack.c.0.s8 %v298
  %v300 = vperm.slane %v292, %v299
  %v301 = vrot.slane %v272, 4
  %v302 = vsel %vm117, %v301, %v260
  %v303 = vrot.slane %v260, 4
  %v304 = vsel %vm117, %v272, %v303
  %v306 = vunpack.c.l.s4 1934713408
  %v307 = vunpack.c.0.s8 %v306
  %v308 = vperm.slane %v302, %v307
  %v310 = vunpack.c.l.s4 1934713408
  %v311 = vunpack.c.0.s8 %v310
  %v312 = vperm.slane %v304, %v311
  %v313 = vrot.slane %v276, 4
  %v314 = vsel %vm117, %v313, %v264
  %v315 = vrot.slane %v264, 4
  %v316 = vsel %vm117, %v276, %v315
  %v318 = vunpack.c.l.s4 1934713408
  %v319 = vunpack.c.0.s8 %v318
  %v320 = vperm.slane %v314, %v319
  %v322 = vunpack.c.l.s4 1934713408
  %v323 = vunpack.c.0.s8 %v322
  %v324 = vperm.slane %v316, %v323
  %v325 = vrot.slane %v308, 4
  %v326 = vsel %vm117, %v325, %v284
  %v327 = vrot.slane %v284, 4
  %v328 = vsel %vm117, %v308, %v327
  %v329 = vrot.slane %v312, 4
  %v330 = vsel %vm117, %v329, %v288
  %v331 = vrot.slane %v288, 4
  %v332 = vsel %vm117, %v312, %v331
  %v333 = vrot.slane %v320, 4
  %v334 = vsel %vm117, %v333, %v296
  %v335 = vrot.slane %v296, 4
  %v336 = vsel %vm117, %v320, %v335
  %v337 = vrot.slane %v324, 4
  %v338 = vsel %vm117, %v337, %v300
  %v339 = vrot.slane %v300, 4
  %v340 = vsel %vm117, %v324, %v339
  %342 = vrot.lane.b32.xlu0 %v216, 32
  %v343 = vpop.permute.xlu0 %342
  %346 = vrot.lane.b32.xlu0 %v218, 64
  %v347 = vpop.permute.xlu0 %346
  %350 = vrot.lane.b32.xlu0 %v220, 96
  %v351 = vpop.permute.xlu0 %350
  %354 = vrot.lane.b32.xlu0 %v224, 32
  %v355 = vpop.permute.xlu0 %354
  %358 = vrot.lane.b32.xlu0 %v226, 64
  %v359 = vpop.permute.xlu0 %358
  %362 = vrot.lane.b32.xlu0 %v228, 96
  %v363 = vpop.permute.xlu0 %362
  %366 = vrot.lane.b32.xlu0 %v328, 32
  %v367 = vpop.permute.xlu0 %366
  %370 = vrot.lane.b32.xlu0 %v330, 64
  %v371 = vpop.permute.xlu0 %370
  %374 = vrot.lane.b32.xlu0 %v332, 96
  %v375 = vpop.permute.xlu0 %374
  %378 = vrot.lane.b32.xlu0 %v336, 32
  %v379 = vpop.permute.xlu0 %378
  %382 = vrot.lane.b32.xlu0 %v338, 64
  %v383 = vpop.permute.xlu0 %382
  %386 = vrot.lane.b32.xlu0 %v340, 96
  %v387 = vpop.permute.xlu0 %386
  %vm389 = vcmask 261120
  %v390 = vsel %vm389, %v214, %v343
  %vm391 = vcmask 523264
  %v392 = vsel %vm391, %v390, %v347
  %vm393 = vcmask 785408
  %v394 = vsel %vm393, %v392, %v351
  %v395 = vsel %vm389, %v222, %v355
  %v396 = vsel %vm391, %v395, %v359
  %v397 = vsel %vm393, %v396, %v363
  %v398 = vsel %vm389, %v326, %v367
  %v399 = vsel %vm391, %v398, %v371
  %v400 = vsel %vm393, %v399, %v375
  %v401 = vsel %vm389, %v334, %v379
  %v402 = vsel %vm391, %v401, %v383
  %v403 = vsel %vm393, %v402, %v387
  %v404 = vld [vmem:[%s1] sm:$0xf]
  %v406 = vperm.slane %v404, 0
  %v407 = vperm.slane %v404, 1
  %v408 = vperm.slane %v404, 2
  %v409 = vperm.slane %v404, 3
  %v414 = vlaneseq
  %v415 = vand.u32 %v414, 127
  %v416 = vadd.s32 %v415, 128
  %v417 = vadd.s32 %v415, 256
  %v418 = vadd.s32 %v415, 384
  %vm419 = vcmp.lt.s32.totalorder %v415, 0
  %v420 = vsub.s32 0, %v415
  %v421 = vsel %vm419, %v420, %v415
  %v422 = vshrl.u32 %v421, 5
  %v423 = vand.u32 %v421, 31
  %v424 = vsub.s32 0, %v423
  %v425 = vsel %vm419, %v424, %v423
  %vm426 = vcmp.lt.s32.totalorder %v416, 0
  %v427 = vsub.s32 0, %v416
  %v428 = vsel %vm426, %v427, %v416
  %v429 = vshrl.u32 %v428, 5
  %v430 = vand.u32 %v428, 31
  %v431 = vsub.s32 0, %v430
  %v432 = vsel %vm426, %v431, %v430
  %vm433 = vcmp.lt.s32.totalorder %v417, 0
  %v434 = vsub.s32 0, %v417
  %v435 = vsel %vm433, %v434, %v417
  %v436 = vshrl.u32 %v435, 5
  %v437 = vand.u32 %v435, 31
  %v438 = vsub.s32 0, %v437
  %v439 = vsel %vm433, %v438, %v437
  %vm440 = vcmp.lt.s32.totalorder %v418, 0
  %v441 = vsub.s32 0, %v418
  %v442 = vsel %vm440, %v441, %v418
  %v443 = vshrl.u32 %v442, 5
  %v444 = vand.u32 %v442, 31
  %v445 = vsub.s32 0, %v444
  %v446 = vsel %vm440, %v445, %v444
  %vm447 = vcmp.ne.s32.totalorder %v425, 0
  %vm448 = vcmp.ne.s32.totalorder %v432, 0
  %vm449 = vcmp.ne.s32.totalorder %v439, 0
  %vm450 = vcmp.ne.s32.totalorder %v446, 0
  %vm451 = vcmp.lt.s32.totalorder %v425, 0
  %vm452 = vcmp.lt.s32.totalorder %v432, 0
  %vm453 = vcmp.lt.s32.totalorder %v439, 0
  %vm454 = vcmp.lt.s32.totalorder %v446, 0
  %vm455 = vmand %vm451, %vm447
  %vm456 = vmand %vm452, %vm448
  %vm457 = vmand %vm453, %vm449
  %vm458 = vmand %vm454, %vm450
  %v459 = vadd.s32 %v425, 32
  %v460 = vadd.s32 %v432, 32
  %v461 = vadd.s32 %v439, 32
  %v462 = vadd.s32 %v446, 32
  %v463 = vsel %vm455, %v459, %v425
  %v464 = vsel %vm456, %v460, %v432
  %v465 = vsel %vm457, %v461, %v439
  %v466 = vsel %vm458, %v462, %v446
  %vm467 = vcmp.eq.s32.totalorder %v463, 0
  %vm468 = vcmp.eq.s32.totalorder %v464, 0
  %vm469 = vcmp.eq.s32.totalorder %v465, 0
  %vm470 = vcmp.eq.s32.totalorder %v466, 0
  %v471 = vsel %vm467, %v394, %v406
  %v472 = vsel %vm468, %v397, %v407
  %v473 = vsel %vm469, %v400, %v408
  %v474 = vsel %vm470, %v403, %v409
  %475 = vst [vmem:[%s2] sm:$0xff] %v471
  %476 = vst [vmem:[%s2 + $0x8] sm:$0xff] %v472
  %477 = vst [vmem:[%s2 + $0x10] sm:$0xff] %v473
  %478 = vst [vmem:[%s2 + $0x18] sm:$0xff] %v474
  // Predicated region
  $region10: #{_gene_embeddings_flat.1} parent=0 // pred_check
    _
  $region11: #{_gene_embeddings_flat.1} parent=0 // pred_check_branch
    %480 = sbr.rel (0) target = $region13
  $region12: #{_gene_embeddings_flat.1} parent=0 // pred_region
    _
  $region13: #{_gene_embeddings_flat.1} parent=0 // pred_fallthru
    _
  // Predicated region
  $region14: #{_gene_embeddings_flat.1} parent=0 // pred_check
    _
  $region15: #{_gene_embeddings_flat.1} parent=0 // pred_check_branch
    %482 = sbr.rel (0) target = $region17
  $region16: #{_gene_embeddings_flat.1} parent=0 // pred_region
    _
  $region17: #{_gene_embeddings_flat.1} parent=0 // pred_fallthru
    _

// kernel: _gene_embeddings_blocked.1
$region0: #{_gene_embeddings_blocked.1}
  #allocation0 [shape = 'u32[]', space=smem, size = 0x4, offset = 0x4, fixed_abs, tag = 'smem constant byte address 0x4 - core index']
  #allocation1 [shape = 'u32[72,128]{1,0:T(1,128)}', space=vmem, size = 0x9000, scoped, tag = 'internal scratch']
  %s0 = inlined_call_operand.vmem [shape: f32[8,16], index: 0, kind: input, shape index: {}]
  %s1 = inlined_call_operand.vmem [shape: f32[16,32], index: 1, kind: input, shape index: {}]
  %s2 = inlined_call_operand.hbm [shape: f32[8,16,32], index: 2, kind: output, shape index: {}]
  %s3 = sld [smem:[#allocation0]]
  $region18: #{_gene_embeddings_blocked.1} parent=0
    _
  %s5 = ssub.s32 1, %s3
  %s6 = scalar_select 0, %s5, %s3
  $region1: #{_gene_embeddings_blocked.1} parent=0
    #allocation2 [shape = 'u8[65536]{0}', space=vmem, size = 0x10000, scoped, tag = 'output window, operand 0, single buffered']
    #allocation3 [shape = 's32[1]{0}', space=sflag, size = 0x4, scoped, tag = 'scoped memory for _gene_embeddings_blocked.1']
    %7 = vsyncpa [#allocation3], 0
    // Predicated region
    $region2: #{_gene_embeddings_blocked.1} parent=1 // pred_check
      _
    $region3: #{_gene_embeddings_blocked.1} parent=1 // pred_check_branch
      %9 = sbr.rel (0) target = $region5
    $region4: #{_gene_embeddings_blocked.1} parent=1 // pred_region
      _
    $region5: #{_gene_embeddings_blocked.1} parent=1 // pred_fallthru
      _
    // Predicated region
    $region6: #{_gene_embeddings_blocked.1} parent=1 // pred_check
      _
    $region7: #{_gene_embeddings_blocked.1} parent=1 // pred_check_branch
      %11 = sbr.rel (0) target = $region9
    $region8: #{_gene_embeddings_blocked.1} parent=1 // pred_region
      _
    $region9: #{_gene_embeddings_blocked.1} parent=1 // pred_fallthru
      _
    %v12 = vlaneseq
    %v13 = vand.u32 %v12, 127
    %vm14 = vcmp.eq.s32.totalorder %v13, 0
    %v15 = vld [vmem:[%s0] sm:$0xff]
    %v16 = vperm.slane %v15, 0
    %v17 = vlaneseq
    %v18 = vshrl.u32 %v17, 7
    %20 = vset.pattern.permute.xlu0 %v18
    %21 = vperm.xlu0 %20, %v16
    %v22 = vpop.permute.xlu0 %21
    %v23 = vlaneseq
    %v24 = vshrl.u32 %v23, 7
    %v25 = vadd.s32 %v24, 8
    %26 = vset.pattern.permute.xlu0 %v25
    %27 = vperm.xlu0 %26, %v16
    %v28 = vpop.permute.xlu0 %27
    %v29 = vperm.slane %v15, 1
    %v30 = vlaneseq
    %v31 = vshrl.u32 %v30, 7
    %33 = vset.pattern.permute.xlu0 %v31
    %34 = vperm.xlu0 %33, %v29
    %v35 = vpop.permute.xlu0 %34
    %v36 = vlaneseq
    %v37 = vshrl.u32 %v36, 7
    %v38 = vadd.s32 %v37, 8
    %39 = vset.pattern.permute.xlu0 %v38
    %40 = vperm.xlu0 %39, %v29
    %v41 = vpop.permute.xlu0 %40
    %v42 = vperm.slane %v15, 2
    %v43 = vlaneseq
    %v44 = vshrl.u32 %v43, 7
    %46 = vset.pattern.permute.xlu0 %v44
    %47 = vperm.xlu0 %46, %v42
    %v48 = vpop.permute.xlu0 %47
    %v49 = vlaneseq
    %v50 = vshrl.u32 %v49, 7
    %v51 = vadd.s32 %v50, 8
    %52 = vset.pattern.permute.xlu0 %v51
    %53 = vperm.xlu0 %52, %v42
    %v54 = vpop.permute.xlu0 %53
    %v55 = vperm.slane %v15, 3
    %v56 = vlaneseq
    %v57 = vshrl.u32 %v56, 7
    %59 = vset.pattern.permute.xlu0 %v57
    %60 = vperm.xlu0 %59, %v55
    %v61 = vpop.permute.xlu0 %60
    %v62 = vlaneseq
    %v63 = vshrl.u32 %v62, 7
    %v64 = vadd.s32 %v63, 8
    %65 = vset.pattern.permute.xlu0 %v64
    %66 = vperm.xlu0 %65, %v55
    %v67 = vpop.permute.xlu0 %66
    %v68 = vperm.slane %v15, 4
    %v69 = vlaneseq
    %v70 = vshrl.u32 %v69, 7
    %72 = vset.pattern.permute.xlu0 %v70
    %73 = vperm.xlu0 %72, %v68
    %v74 = vpop.permute.xlu0 %73
    %v75 = vlaneseq
    %v76 = vshrl.u32 %v75, 7
    %v77 = vadd.s32 %v76, 8
    %78 = vset.pattern.permute.xlu0 %v77
    %79 = vperm.xlu0 %78, %v68
    %v80 = vpop.permute.xlu0 %79
    %v81 = vperm.slane %v15, 5
    %v82 = vlaneseq
    %v83 = vshrl.u32 %v82, 7
    %85 = vset.pattern.permute.xlu0 %v83
    %86 = vperm.xlu0 %85, %v81
    %v87 = vpop.permute.xlu0 %86
    %v88 = vlaneseq
    %v89 = vshrl.u32 %v88, 7
    %v90 = vadd.s32 %v89, 8
    %91 = vset.pattern.permute.xlu0 %v90
    %92 = vperm.xlu0 %91, %v81
    %v93 = vpop.permute.xlu0 %92
    %v94 = vperm.slane %v15, 6
    %v95 = vlaneseq
    %v96 = vshrl.u32 %v95, 7
    %98 = vset.pattern.permute.xlu0 %v96
    %99 = vperm.xlu0 %98, %v94
    %v100 = vpop.permute.xlu0 %99
    %v101 = vlaneseq
    %v102 = vshrl.u32 %v101, 7
    %v103 = vadd.s32 %v102, 8
    %104 = vset.pattern.permute.xlu0 %v103
    %105 = vperm.xlu0 %104, %v94
    %v106 = vpop.permute.xlu0 %105
    %v107 = vperm.slane %v15, 7
    %v108 = vlaneseq
    %v109 = vshrl.u32 %v108, 7
    %111 = vset.pattern.permute.xlu0 %v109
    %112 = vperm.xlu0 %111, %v107
    %v113 = vpop.permute.xlu0 %112
    %v114 = vlaneseq
    %v115 = vshrl.u32 %v114, 7
    %v116 = vadd.s32 %v115, 8
    %117 = vset.pattern.permute.xlu0 %v116
    %118 = vperm.xlu0 %117, %v107
    %v119 = vpop.permute.xlu0 %118
    %v120 = vld [vmem:[%s1] sm:$0xff]
    %v121 = vld [vmem:[%s1 + $0x8] sm:$0xff]
    %v122 = vsel %vm14, 1, 0
    %vm123 = vcmp.eq.s32.totalorder %v122, 1
    %v124 = vsel %vm123, %v22, %v120
    %v125 = vsel %vm123, %v28, %v121
    %v126 = vsel %vm123, %v35, %v120
    %v127 = vsel %vm123, %v41, %v121
    %v128 = vsel %vm123, %v48, %v120
    %v129 = vsel %vm123, %v54, %v121
    %v130 = vsel %vm123, %v61, %v120
    %v131 = vsel %vm123, %v67, %v121
    %v132 = vsel %vm123, %v74, %v120
    %v133 = vsel %vm123, %v80, %v121
    %v134 = vsel %vm123, %v87, %v120
    %v135 = vsel %vm123, %v93, %v121
    %v136 = vsel %vm123, %v100, %v120
    %v137 = vsel %vm123, %v106, %v121
    %v138 = vsel %vm123, %v113, %v120
    %v139 = vsel %vm123, %v119, %v121
    %vm140 = vcmask 261120
    %141 = vst.msk [vmem:[#allocation2] sm:$0xff] %vm140, %v124
    %142 = vst.msk [vmem:[#allocation2 + $0x8] sm:$0xff] %vm140, %v125
    %143 = vst.msk [vmem:[#allocation2 + $0x10] sm:$0xff] %vm140, %v126
    %144 = vst.msk [vmem:[#allocation2 + $0x18] sm:$0xff] %vm140, %v127
    %145 = vst.msk [vmem:[#allocation2 + $0x20] sm:$0xff] %vm140, %v128
    %146 = vst.msk [vmem:[#allocation2 + $0x28] sm:$0xff] %vm140, %v129
    %147 = vst.msk [vmem:[#allocation2 + $0x30] sm:$0xff] %vm140, %v130
    %148 = vst.msk [vmem:[#allocation2 + $0x38] sm:$0xff] %vm140, %v131
    %149 = vst.msk [vmem:[#allocation2 + $0x40] sm:$0xff] %vm140, %v132
    %150 = vst.msk [vmem:[#allocation2 + $0x48] sm:$0xff] %vm140, %v133
    %151 = vst.msk [vmem:[#allocation2 + $0x50] sm:$0xff] %vm140, %v134
    %152 = vst.msk [vmem:[#allocation2 + $0x58] sm:$0xff] %vm140, %v135
    %153 = vst.msk [vmem:[#allocation2 + $0x60] sm:$0xff] %vm140, %v136
    %154 = vst.msk [vmem:[#allocation2 + $0x68] sm:$0xff] %vm140, %v137
    %155 = vst.msk [vmem:[#allocation2 + $0x70] sm:$0xff] %vm140, %v138
    %156 = vst.msk [vmem:[#allocation2 + $0x78] sm:$0xff] %vm140, %v139
    // Predicated region
    $region10: #{_gene_embeddings_blocked.1} parent=1 // pred_check
      _
    $region11: #{_gene_embeddings_blocked.1} parent=1 // pred_check_branch
      %158 = sbr.rel (0) target = $region13
    $region12: #{_gene_embeddings_blocked.1} parent=1 // pred_region
      %160 = vsyncadd [#allocation3], 0
      %s161 = sshll.u32 [#allocation2], 4
      %s162 = int_to_ptr.vmem [resolvable:$true] %s161
      %s163 = sshll.u32 %s2, 4
      %s164 = int_to_ptr.hbm [resolvable:$true] %s163
      %169 = dma.vmem_to_hbm [thread:$0]  %s162, 2048, %s164, [#allocation3], 128, 128, 8
    $region13: #{_gene_embeddings_blocked.1} parent=1 // pred_fallthru
      _
    // Predicated region
    $region14: #{_gene_embeddings_blocked.1} parent=1 // pred_check
      _
    $region15: #{_gene_embeddings_blocked.1} parent=1 // pred_check_branch
      %171 = sbr.rel (0) target = $region17
    $region16: #{_gene_embeddings_blocked.1} parent=1 // pred_region
      %173 = dma.done [#allocation3], 2048
    $region17: #{_gene_embeddings_blocked.1} parent=1 // pred_fallthru
      _
    %174 = vsyncpa [#allocation3], 1

</llo_original>
